<compile_context>
chip_gen: v7x
topology: tpu7x:2x2x1
jax: 0.10.0
libtpu: 0.0.40
codegen_flags: <defaults>
</compile_context>

<pallas_src>
import functools

import jax
import jax.numpy as jnp
from jax import lax
from jax.experimental import pallas as pl
from jax.experimental.pallas import tpu as pltpu

_EPS = 1e-12                  # matches torch.nn.functional.normalize default
_MIN_PALLAS_ELEMENTS = 64 * 1024   # below this, plain-JAX beats kernel launch overhead
_MIN_PALLAS_HIDDEN = 128           # lane-dense stores need last dim >= 128


def _cdiv(a: int, b: int) -> int:
    return -(-a // b)


def _round_up(x: int, m: int) -> int:
    return ((x + m - 1) // m) * m


def _vmem_budget_bytes() -> int:
    """Per-kernel VMEM budget (generation aware when queryable)."""
    try:
        info = pltpu.get_tpu_info()
        cap = int(info.vmem_capacity_bytes)
        # ~1/3 of physical VMEM; intermediates are budgeted explicitly below.
        return max(8 << 20, cap // 3)
    except Exception:
        return 16 << 20  # safe on v5e / v6e / v7x


def _num_tensorcores() -> int:
    """Best-effort TensorCores-per-chip query (v7x has 2); defaults to 1."""
    try:
        info = pltpu.get_tpu_info()
        for attr in ("num_tensorcores", "num_cores", "tensorcores_per_chip",
                     "cores_per_chip"):
            v = getattr(info, attr, None)
            if v:
                return int(v)
    except Exception:
        pass
    try:
        v = getattr(jax.devices()[0], "num_cores", None)
        if v:
            return int(v)
    except Exception:
        pass
    return 1


def _f32_tmp_tiles(normalize: bool, softmax: bool) -> int:
    # f32 cast tile is always live across the row reduce; normalize and softmax each
    # add (at most) one more block-sized f32 intermediate that Mosaic may materialize.
    return 1 + int(normalize) + int(softmax)


def _choose_block_rows(rows: int, hidden: int, in_itemsize: int,
                       *, normalize: bool, softmax: bool) -> int:
    budget = _vmem_budget_bytes()
    per_row = (2 * hidden * in_itemsize            # double-buffered input block
               + 2 * hidden * 4                    # double-buffered f32 output block
               + _f32_tmp_tiles(normalize, softmax) * hidden * 4)   # live f32 temps
    br = budget // max(per_row, 1)

    # Keep the "parallel" row axis with >= min_steps grid iterations when rows permit:
    # shards across both TensorCores on v7x and gives the pipeline work to overlap.
    min_steps = 4 if _num_tensorcores() >= 2 else 2
    br = min(br, _round_up(_cdiv(rows, min_steps), 8))

    br = max(8, (br // 8) * 8)          # (8,128) rule: row block multiple of 8
    br = min(br, _round_up(rows, 8))
    return br


def _ref_pooler_head(x, *, normalize, softmax):
    """Pure-JAX reference / fallback path (also used for tiny or narrow inputs)."""
    x = x.astype(jnp.float32)
    if normalize:
        norm = jnp.sqrt(jnp.sum(x * x, axis=-1, keepdims=True))
        x = x / jnp.maximum(norm, _EPS)
    if softmax:
        if x.shape[-1] >= 2:
            x = jax.nn.softmax(x, axis=-1)
        else:
            x = jax.nn.sigmoid(x)
    return x


def _pooler_head_kernel(x_ref, o_ref, *, normalize: bool, softmax: bool):
    # Cast to f32 after the tile lands in VMEM (VPU cast hides under the DMA).
    x = x_ref[...].astype(jnp.float32)
    hidden = x.shape[-1]

    if normalize:
        # F.normalize: x / max(||x||_2, eps)  ==  x * rsqrt(max(sumsq, eps^2))
        sumsq = jnp.sum(x * x, axis=-1, keepdims=True)         # XLU row-reduce
        inv = lax.rsqrt(jnp.maximum(sumsq, _EPS * _EPS))       # EUP, (rows, 1)
        x = x * inv                                            # broadcast mul

    if softmax:
        if hidden >= 2:  # trace-time branch: hidden is static
            m = jnp.max(x, axis=-1, keepdims=True)             # XLU
            e = jnp.exp(x - m)                                 # EUP
            s = jnp.sum(e, axis=-1, keepdims=True)             # XLU
            x = e / s                                          # (rows,1) divide, exact
        else:
            x = jax.nn.sigmoid(x)

    o_ref[...] = x


def _pooler_head_2d(x2: jax.Array, *, normalize: bool, softmax: bool) -> jax.Array:
    """Apply PoolerHead activation to a [rows, hidden] array. Returns float32."""
    rows, hidden = x2.shape

    # Tiny / narrow inputs: Pallas launch + per-step overhead and lane-sparse stores
    # would dominate -> plain JAX.
    if rows < 8 or hidden < _MIN_PALLAS_HIDDEN or rows * hidden < _MIN_PALLAS_ELEMENTS:
        return _ref_pooler_head(x2, normalize=normalize, softmax=softmax)

    in_itemsize = x2.dtype.itemsize
    block_rows = _choose_block_rows(rows, hidden, in_itemsize,
                                    normalize=normalize, softmax=softmax)
    grid = (_cdiv(rows, block_rows),)   # boundary block clipped by Pallas; no host pad

    vmem_limit = (2 * block_rows * hidden * in_itemsize
                  + 2 * block_rows * hidden * 4
                  + _f32_tmp_tiles(normalize, softmax) * block_rows * hidden * 4
                  + (2 << 20))          # compiler scratch headroom

    kernel = functools.partial(_pooler_head_kernel,
                               normalize=normalize, softmax=softmax)

    out = pl.pallas_call(
        kernel,
        out_shape=jax.ShapeDtypeStruct((rows, hidden), jnp.float32),
        grid_spec=pl.GridSpec(
            grid=grid,
            in_specs=[pl.BlockSpec((block_rows, hidden), lambda i: (i, 0))],
            out_specs=pl.BlockSpec((block_rows, hidden), lambda i: (i, 0)),
        ),
        compiler_params=pltpu.CompilerParams(
            dimension_semantics=("parallel",),
            vmem_limit_bytes=int(vmem_limit),
        ),
    )(x2)
    return out


class PoolerHead:
    """JAX/Pallas port of vLLM PoolerHead.forward."""

    def __init__(self, *, normalize: bool, softmax: bool) -> None:
        self.normalize = normalize
        self.softmax = softmax

    def _apply(self, x: jax.Array) -> jax.Array:
        orig_shape = x.shape
        hidden = orig_shape[-1]
        x2 = x.reshape(-1, hidden)
        out = _pooler_head_2d(x2, normalize=self.normalize, softmax=self.softmax)
        return out.reshape(orig_shape)

    def _apply_list(self, items):
        # Batch same-hidden requests into a single kernel call (one launch per unique
        # hidden dim instead of one per request).
        groups = {}
        for idx, v in enumerate(items):
            groups.setdefault(int(v.shape[-1]), []).append(idx)
        out = [None] * len(items)
        for hidden, idxs in groups.items():
            flats = [items[i].reshape(-1, hidden) for i in idxs]
            row_counts = [f.shape[0] for f in flats]
            batched = flats[0] if len(flats) == 1 else jnp.concatenate(flats, axis=0)
            res = _pooler_head_2d(batched, normalize=self.normalize,
                                  softmax=self.softmax)
            off = 0
            for i, n in zip(idxs, row_counts):
                out[i] = res[off:off + n].reshape(items[i].shape)
                off += n
        return out

    def __call__(self, pooled_data, dimensions_list=None):
        # list-of-tensors path (possibly ragged / per-request matryoshka dims)
        if isinstance(pooled_data, list):
            if dimensions_list is not None:
                assert len(pooled_data) == len(dimensions_list)
                pooled_data = [v if d is None else v[..., :d]
                               for v, d in zip(pooled_data, dimensions_list)]
            return self._apply_list(pooled_data)

        # single batched tensor path
        if dimensions_list is not None and any(d is not None for d in dimensions_list):
            assert len(set(dimensions_list)) == 1, \
                "batched-tensor path requires a uniform matryoshka dimension"
            d = dimensions_list[0]
            pooled_data = pooled_data[..., :d]
        return self._apply(pooled_data)


# ------------------------------------- demo ------------------------------------------

if __name__ == "__main__":
    key = jax.random.PRNGKey(0)

    # Pallas-path shapes: rows deliberately NOT a multiple of the block size so the
    # boundary-block clipping path is exercised; hidden >= 128 keeps stores lane-dense.
    num_seqs, hidden = 136, 512
    x = jax.random.normal(key, (num_seqs, hidden), dtype=jnp.float32).astype(jnp.bfloat16)

    # 1) normalize head (embedding models) -> Pallas kernel path
    head_norm = PoolerHead(normalize=True, softmax=False)
    out_norm = jax.block_until_ready(head_norm(x))
    ref_norm = _ref_pooler_head(x, normalize=True, softmax=False)
    assert out_norm.dtype == jnp.float32
    assert out_norm.shape == (num_seqs, hidden)
    assert jnp.allclose(out_norm, ref_norm, atol=1e-3, rtol=1e-3)

    # 2) softmax head (classifier / reward models) -> Pallas kernel path
    head_soft = PoolerHead(normalize=False, softmax=True)
    out_soft = jax.block_until_ready(head_soft(x))
    ref_soft = _ref_pooler_head(x, normalize=False, softmax=True)
    assert jnp.allclose(out_soft, ref_soft, atol=1e-3, rtol=1e-3)

    # 3) uniform matryoshka slice on the batched tensor (d=256)
    out_mat = jax.block_until_ready(head_norm(x, dimensions_list=[256] * num_seqs))
    ref_mat = _ref_pooler_head(x[..., :256], normalize=True, softmax=False)
    assert out_mat.shape == (num_seqs, 256)
    assert jnp.allclose(out_mat, ref_mat, atol=1e-3, rtol=1e-3)

    # 4) list path with per-request matryoshka dims (tiny requests -> batched / fallback)
    items = [x[0:1], x[1:2]]
    out_list = head_norm(items, dimensions_list=[None, 128])
    out_list = [jax.block_until_ready(o) for o in out_list]
    assert out_list[0].shape == (1, hidden) and out_list[1].shape == (1, 128)
    assert jnp.allclose(out_list[0], _ref_pooler_head(x[0:1], normalize=True,
                                                      softmax=False), atol=1e-3, rtol=1e-3)
    assert jnp.allclose(out_list[1], _ref_pooler_head(x[1:2, :128], normalize=True,
                                                      softmax=False), atol=1e-3, rtol=1e-3)

    # 5) small-shape sanity (routed through the plain-JAX fallback by design)
    xs = jax.random.normal(jax.random.PRNGKey(1), (8, 32), dtype=jnp.float32)
    out_small = jax.block_until_ready(head_soft(xs))
    assert jnp.allclose(out_small, _ref_pooler_head(xs, normalize=False, softmax=True),
                        atol=1e-5, rtol=1e-5)

    print("KERNEL_OK")
</pallas_src>

<mosaic_0001>
module attributes {stable_mosaic.version = 11 : i64} {
  func.func @_pooler_head_kernel(%arg0: i32, %arg1: memref<72x512xbf16, #tpu.memory_space<vmem>>, %arg2: memref<72x512xf32, #tpu.memory_space<vmem>>) attributes {dimension_semantics = [#tpu.dimension_semantics<parallel>], iteration_bounds = array<i64: 2>, scalar_prefetch = 0 : i64, scratch_operands = 0 : i64, tpu.core_type = #tpu.core_type<tc>, window_params = [{transform_indices = @transform_0, window_bounds = array<i64: 72, 512>}, {transform_indices = @transform_1, window_bounds = array<i64: 72, 512>}]} {
    %c0 = arith.constant 0 : index
    %c0_0 = arith.constant 0 : index
    %0 = vector.load %arg1[%c0, %c0_0] : memref<72x512xbf16, #tpu.memory_space<vmem>>, vector<72x512xbf16>
    %1 = arith.extf %0 : vector<72x512xbf16> to vector<72x512xf32>
    %2 = arith.mulf %1, %1 : vector<72x512xf32>
    %cst = arith.constant dense<0.000000e+00> : vector<72xf32>
    %3 = vector.multi_reduction <add>, %2, %cst [1] : vector<72x512xf32> to vector<72xf32>
    %4 = vector.shape_cast %3 : vector<72xf32> to vector<72x1xf32>
    %cst_1 = arith.constant 1.000000e-24 : f32
    %5 = vector.broadcast %cst_1 : f32 to vector<72x1xf32>
    %6 = arith.maximumf %4, %5 : vector<72x1xf32>
    %7 = math.rsqrt %6 : vector<72x1xf32>
    %8 = vector.broadcast %7 : vector<72x1xf32> to vector<72x512xf32>
    %9 = arith.mulf %1, %8 : vector<72x512xf32>
    %c0_2 = arith.constant 0 : index
    %c0_3 = arith.constant 0 : index
    %10 = vector.load %arg2[%c0_2, %c0_3] : memref<72x512xf32, #tpu.memory_space<vmem>>, vector<72x512xf32>
    tpu.vector_store %arg2[%c0_2, %c0_3], %9 {strides = array<i32>} : memref<72x512xf32, #tpu.memory_space<vmem>>, vector<72x512xf32>,
    return
  }
  func.func @transform_0(%arg0: i32) -> (i32, i32) {
    %c0_i32 = arith.constant 0 : i32
    %c0_i32_0 = arith.constant 0 : i32
    return %arg0, %c0_i32 : i32, i32
  }
  func.func @transform_1(%arg0: i32) -> (i32, i32) {
    %c0_i32 = arith.constant 0 : i32
    %c0_i32_0 = arith.constant 0 : i32
    return %arg0, %c0_i32 : i32, i32
  }
}

</mosaic_0001>

<llo_original>
// kernel: tpu_custom_call.1
$region0: #{tpu_custom_call.1}
  #allocation0 [shape = 'u32[]', space=smem, size = 0x4, offset = 0x4, fixed_abs, tag = 'smem constant byte address 0x4 - core index']
  #allocation1 [shape = 'u32[144,128]{1,0:T(1,128)}', space=vmem, size = 0x12000, scoped, tag = 'internal scratch']
  %s0 = inlined_call_operand.hbm [shape: bf16[136,512], index: 0, kind: input, shape index: {}]
  %s1 = inlined_call_operand.hbm [shape: f32[136,512], index: 1, kind: output, shape index: {}]
  %s2 = sld [smem:[#allocation0]]
  $region41: #{tpu_custom_call.1} parent=0
    _
  %s4 = ssub.s32 1, %s2
  %s5 = scalar_select 0, %s4, %s2
  $region1: #{tpu_custom_call.1} parent=0
    #allocation2 [shape = 'u8[147456]{0}', space=vmem, size = 0x24000, scoped, tag = 'input window, operand 0']
    #allocation3 [shape = 's32[2]{0}', space=sflag, size = 0x8, scoped, tag = 'scoped memory for tpu_custom_call.1']
    #allocation4 [shape = 's32[2]{0}', space=sflag, size = 0x8, scoped, tag = 'scoped memory for tpu_custom_call.1']
    #allocation5 [shape = 'u8[294912]{0}', space=vmem, size = 0x48000, scoped, tag = 'output window, operand 0']
    %6 = vsyncpa [#allocation3], 0
    %s7 = scalar_lea.sflag [#allocation3], 1
    %8 = vsyncpa %s7, 0
    %9 = vsyncpa [#allocation4], 0
    %s10 = scalar_lea.sflag [#allocation4], 1
    %11 = vsyncpa %s10, 0
    loop: start=0, step=1, limit=4
    $region2: #{tpu_custom_call.1} parent=1 // loop_pre_header
      _
    $region3: #{tpu_custom_call.1} parent=1 // loop_header
      %s13 = sphi 0, %s17
      %p14 = scmp.ge.s32.totalorder %s13, 4
      %s23 = sphi 0, %s25
      %s26 = sphi 0, %s23
      %s27 = sphi 0, %s26
      %s43 = sphi 0, %s27
      %s49 = sphi 0, %s51
      %s52 = sphi 0, %s49
      %s53 = sphi 0, %s52
      %s69 = sphi 0, %s53
    $region4: #{tpu_custom_call.1} parent=1 // loop_header_branch
      %16 = sbr.rel (%p14) target = $region8
    $region5: #{tpu_custom_call.1} parent=1 // loop_body
      %s18 = ssub.s32 %s13, 1
      %s19 = ssub.s32 %s13, 2
      %s20 = sadd.s32 %s13, 1
      %s21 = ssub.s32 %s13, %s20
      %p22 = scmp.eq.s32.totalorder %s21, 0
      %s24 = sadd.s32 %s23, 1
      %s25 = scalar_select %p22, %s23, %s24
      %p28 = pneg %p22
      %p29 = scmp.eq.s32.totalorder %s13, 1
      %p30 = por %p28, %p29
      %p31 = scmp.ne.s32.totalorder %s23, %s26
      %p32 = scmp.eq.s32.totalorder %s13, 0
      %p33 = por %p31, %p32
      %p34 = scmp.ne.s32.totalorder %s23, %s26
      %p35 = scmp.eq.s32.totalorder %s18, 1
      %p36 = por %p34, %p35
      %p37 = scmp.ne.s32.totalorder %s26, %s27
      %p38 = scmp.eq.s32.totalorder %s18, 0
      %p39 = por %p37, %p38
      %p40 = scmp.ne.s32.totalorder %s26, %s27
      %p41 = scmp.eq.s32.totalorder %s19, 1
      %p42 = por %p40, %p41
      %p44 = scmp.ne.s32.totalorder %s27, %s43
      %p45 = scmp.eq.s32.totalorder %s19, 0
      %p46 = por %p44, %p45
      %s47 = ssub.s32 %s13, %s20
      %p48 = scmp.eq.s32.totalorder %s47, 0
      %s50 = sadd.s32 %s49, 1
      %s51 = scalar_select %p48, %s49, %s50
      %p54 = pneg %p48
      %p55 = scmp.eq.s32.totalorder %s13, 1
      %p56 = por %p54, %p55
      %p57 = scmp.ne.s32.totalorder %s49, %s52
      %p58 = scmp.eq.s32.totalorder %s13, 0
      %p59 = por %p57, %p58
      %p60 = scmp.ne.s32.totalorder %s49, %s52
      %p61 = scmp.eq.s32.totalorder %s18, 1
      %p62 = por %p60, %p61
      %p63 = scmp.ne.s32.totalorder %s52, %s53
      %p64 = scmp.eq.s32.totalorder %s18, 0
      %p65 = por %p63, %p64
      %p66 = scmp.ne.s32.totalorder %s52, %s53
      %p67 = scmp.eq.s32.totalorder %s19, 1
      %p68 = por %p66, %p67
      %p70 = scmp.ne.s32.totalorder %s53, %s69
      %p71 = scmp.eq.s32.totalorder %s19, 0
      %p72 = por %p70, %p71
      %p73 = scmp.le.s32.totalorder 1, %s13
      %p74 = scmp.lt.s32.totalorder %s13, 3
      %p75 = pnand %p73, %p74
      %p76 = pneg %p75
      // Predicated region
      $region9: #{tpu_custom_call.1} parent=5 // pred_check
        _
      $region10: #{tpu_custom_call.1} parent=5 // pred_check_branch
        %78 = sbr.rel (%p75) target = $region12
      $region11: #{tpu_custom_call.1} parent=5 // pred_region
        %s79 = ssub.s32 %s13, 1
      $region12: #{tpu_custom_call.1} parent=5 // pred_fallthru
        _
      %p80 = scmp.lt.s32.totalorder %s13, 2
      // Predicated region
      $region13: #{tpu_custom_call.1} parent=5 // pred_check
        %p81 = pneg %p80
      $region14: #{tpu_custom_call.1} parent=5 // pred_check_branch
        %83 = sbr.rel (%p81) target = $region16
      $region15: #{tpu_custom_call.1} parent=5 // pred_region
        // Predicated region
        $region17: #{tpu_custom_call.1} parent=15 // pred_check
          %p84 = pneg %p33
        $region18: #{tpu_custom_call.1} parent=15 // pred_check_branch
          %86 = sbr.rel (%p84) target = $region20
        $region19: #{tpu_custom_call.1} parent=15 // pred_region
          %s87 = sand.u32 %s23, 1
          %s88 = scalar_lea.sflag [#allocation3], %s87
          %s89 = sand.u32 %s23, 1
          %s90 = smul.addr %s89, 144
          %s91 = scalar_lea.vmem [#allocation2], %s90
          %s92 = smul.u32 9, %s13
          %s93 = ssub.s32 17, %s92
          %p94 = scmp.lt.s32.totalorder %s93, 9
          %s95 = scalar_select %p94, %s93, 9
          %s96 = smul.u32 64, %s95
          %s97 = smul.u32 %s96, 4
          %s99 = ssub.s32 2304, %s97
          %100 = vsyncadd %s88, %s99
          %p101 = scmp.ne.s32.totalorder 0, %s97
          %s102 = smul.addr %s92, 4
          %s103 = smul.addr %s102, 64
          %s104 = scalar_lea.hbm %s0, %s103
          %s105 = smul.u32 16, %s95
          %s106 = sshll.u32 %s91, 4
          %s107 = int_to_ptr.vmem [resolvable:$true] %s106
          %s108 = sshll.u32 %s105, 4
          %112 = dma.hbm_to_vmem [thread:$0]  (%p101), %s104, %s108, %s107, %s88, 256, 256, 16
        $region20: #{tpu_custom_call.1} parent=15 // pred_fallthru
          _
      $region16: #{tpu_custom_call.1} parent=5 // pred_fallthru
        _
      %p113 = scmp.le.s32.totalorder 1, %s13
      %p114 = scmp.lt.s32.totalorder %s13, 3
      %p115 = pnand %p113, %p114
      %p116 = pneg %p115
      // Predicated region
      $region21: #{tpu_custom_call.1} parent=5 // pred_check
        _
      $region22: #{tpu_custom_call.1} parent=5 // pred_check_branch
        %118 = sbr.rel (%p115) target = $region24
      $region23: #{tpu_custom_call.1} parent=5 // pred_region
        %s119 = ssub.s32 %s13, 1
        %s120 = sand.u32 %s26, 1
        %s121 = scalar_lea.sflag [#allocation3], %s120
        %s122 = sand.u32 %s26, 1
        %s123 = smul.addr %s122, 144
        %s124 = scalar_lea.vmem [#allocation2], %s123
        // Predicated region
        $region25: #{tpu_custom_call.1} parent=23 // pred_check
          %p125 = pneg %p39
        $region26: #{tpu_custom_call.1} parent=23 // pred_check_branch
          %127 = sbr.rel (%p125) target = $region28
        $region27: #{tpu_custom_call.1} parent=23 // pred_region
          %128 = dma.done %s121, 2304
        $region28: #{tpu_custom_call.1} parent=23 // pred_fallthru
          _
        %s129 = sand.u32 %s26, 1
        %s130 = scalar_lea.sflag [#allocation3], %s129
        %s131 = sand.u32 %s26, 1
        %s132 = smul.addr %s131, 144
        %s133 = scalar_lea.vmem [#allocation2], %s132
        %p134 = pneg %p39
        %p135 = pneg %p36
        %p136 = pneg %p65
        %p137 = pneg %p62
        %s138 = sand.u32 %s52, 1
        %s139 = scalar_lea.sflag [#allocation4], %s138
        %s140 = sand.u32 %s52, 1
        %s141 = smul.addr %s140, 288
        %s142 = scalar_lea.vmem [#allocation5], %s141
        %s143 = smul.u32 9, %s18
        %s144 = ssub.s32 17, %s143
        %p145 = scmp.lt.s32.totalorder %s144, 9
        %s146 = scalar_select %p145, %s144, 9
        %s147 = smul.u32 64, %s146
        %s148 = smul.u32 %s147, 4
        %s149 = smul.u32 9, %s18
        %s150 = ssub.s32 17, %s149
        %p151 = scmp.lt.s32.totalorder %s150, 9
        %s152 = scalar_select %p151, %s150, 9
        %s153 = smul.u32 128, %s152
        %s154 = smul.u32 %s153, 4
        %v155 = vld [vmem:[%s124] sm:$0xff]
        %v156 = vld [vmem:[%s124 + $0x8] sm:$0xff]
        %v157 = vld [vmem:[%s124 + $0x10] sm:$0xff]
        %v158 = vld [vmem:[%s124 + $0x18] sm:$0xff]
        %v159 = vld [vmem:[%s124 + $0x20] sm:$0xff]
        %v160 = vld [vmem:[%s124 + $0x28] sm:$0xff]
        %v161 = vld [vmem:[%s124 + $0x30] sm:$0xff]
        %v162 = vld [vmem:[%s124 + $0x38] sm:$0xff]
        %v163 = vld [vmem:[%s124 + $0x40] sm:$0xff]
        %v164 = vld [vmem:[%s124 + $0x48] sm:$0xff]
        %v165 = vld [vmem:[%s124 + $0x50] sm:$0xff]
        %v166 = vld [vmem:[%s124 + $0x58] sm:$0xff]
        %v167 = vld [vmem:[%s124 + $0x60] sm:$0xff]
        %v168 = vld [vmem:[%s124 + $0x68] sm:$0xff]
        %v169 = vld [vmem:[%s124 + $0x70] sm:$0xff]
        %v170 = vld [vmem:[%s124 + $0x78] sm:$0xff]
        %v171 = vld [vmem:[%s124 + $0x80] sm:$0xff]
        %v172 = vld [vmem:[%s124 + $0x88] sm:$0xff]
        %v173 = vunpack.c.l.bf16 %v155
        %v174 = vunpack.c.h.bf16 %v155
        %v175 = vunpack.c.l.bf16 %v156
        %v176 = vunpack.c.h.bf16 %v156
        %v177 = vunpack.c.l.bf16 %v157
        %v178 = vunpack.c.h.bf16 %v157
        %v179 = vunpack.c.l.bf16 %v158
        %v180 = vunpack.c.h.bf16 %v158
        %v181 = vunpack.c.l.bf16 %v159
        %v182 = vunpack.c.h.bf16 %v159
        %v183 = vunpack.c.l.bf16 %v160
        %v184 = vunpack.c.h.bf16 %v160
        %v185 = vunpack.c.l.bf16 %v161
        %v186 = vunpack.c.h.bf16 %v161
        %v187 = vunpack.c.l.bf16 %v162
        %v188 = vunpack.c.h.bf16 %v162
        %v189 = vunpack.c.l.bf16 %v163
        %v190 = vunpack.c.h.bf16 %v163
        %v191 = vunpack.c.l.bf16 %v164
        %v192 = vunpack.c.h.bf16 %v164
        %v193 = vunpack.c.l.bf16 %v165
        %v194 = vunpack.c.h.bf16 %v165
        %v195 = vunpack.c.l.bf16 %v166
        %v196 = vunpack.c.h.bf16 %v166
        %v197 = vunpack.c.l.bf16 %v167
        %v198 = vunpack.c.h.bf16 %v167
        %v199 = vunpack.c.l.bf16 %v168
        %v200 = vunpack.c.h.bf16 %v168
        %v201 = vunpack.c.l.bf16 %v169
        %v202 = vunpack.c.h.bf16 %v169
        %v203 = vunpack.c.l.bf16 %v170
        %v204 = vunpack.c.h.bf16 %v170
        %v205 = vunpack.c.l.bf16 %v171
        %v206 = vunpack.c.h.bf16 %v171
        %v207 = vunpack.c.l.bf16 %v172
        %v208 = vunpack.c.h.bf16 %v172
        %v209 = vmul.f32 %v173, %v173
        %v210 = vmul.f32 %v174, %v174
        %v211 = vmul.f32 %v175, %v175
        %v212 = vmul.f32 %v176, %v176
        %v213 = vmul.f32 %v177, %v177
        %v214 = vmul.f32 %v178, %v178
        %v215 = vmul.f32 %v179, %v179
        %v216 = vmul.f32 %v180, %v180
        %v217 = vmul.f32 %v181, %v181
        %v218 = vmul.f32 %v182, %v182
        %v219 = vmul.f32 %v183, %v183
        %v220 = vmul.f32 %v184, %v184
        %v221 = vmul.f32 %v185, %v185
        %v222 = vmul.f32 %v186, %v186
        %v223 = vmul.f32 %v187, %v187
        %v224 = vmul.f32 %v188, %v188
        %v225 = vmul.f32 %v189, %v189
        %v226 = vmul.f32 %v190, %v190
        %v227 = vmul.f32 %v191, %v191
        %v228 = vmul.f32 %v192, %v192
        %v229 = vmul.f32 %v193, %v193
        %v230 = vmul.f32 %v194, %v194
        %v231 = vmul.f32 %v195, %v195
        %v232 = vmul.f32 %v196, %v196
        %v233 = vmul.f32 %v197, %v197
        %v234 = vmul.f32 %v198, %v198
        %v235 = vmul.f32 %v199, %v199
        %v236 = vmul.f32 %v200, %v200
        %v237 = vmul.f32 %v201, %v201
        %v238 = vmul.f32 %v202, %v202
        %v239 = vmul.f32 %v203, %v203
        %v240 = vmul.f32 %v204, %v204
        %v241 = vmul.f32 %v205, %v205
        %v242 = vmul.f32 %v206, %v206
        %v243 = vmul.f32 %v207, %v207
        %v244 = vmul.f32 %v208, %v208
        %v245 = vadd.f32 %v209, %v210
        %v246 = vadd.f32 %v245, %v211
        %v247 = vadd.f32 %v246, %v212
        %248 = vadd.xlane.f32.xlu0 %v247
        %v249 = vpop.xlane.xlu0 %248
        %v250 = vadd.f32 %v213, %v214
        %v251 = vadd.f32 %v250, %v215
        %v252 = vadd.f32 %v251, %v216
        %253 = vadd.xlane.f32.xlu0 %v252
        %v254 = vpop.xlane.xlu0 %253
        %v255 = vadd.f32 %v217, %v218
        %v256 = vadd.f32 %v255, %v219
        %v257 = vadd.f32 %v256, %v220
        %258 = vadd.xlane.f32.xlu0 %v257
        %v259 = vpop.xlane.xlu0 %258
        %v260 = vadd.f32 %v221, %v222
        %v261 = vadd.f32 %v260, %v223
        %v262 = vadd.f32 %v261, %v224
        %263 = vadd.xlane.f32.xlu0 %v262
        %v264 = vpop.xlane.xlu0 %263
        %v265 = vadd.f32 %v225, %v226
        %v266 = vadd.f32 %v265, %v227
        %v267 = vadd.f32 %v266, %v228
        %268 = vadd.xlane.f32.xlu0 %v267
        %v269 = vpop.xlane.xlu0 %268
        %v270 = vadd.f32 %v229, %v230
        %v271 = vadd.f32 %v270, %v231
        %v272 = vadd.f32 %v271, %v232
        %273 = vadd.xlane.f32.xlu0 %v272
        %v274 = vpop.xlane.xlu0 %273
        %v275 = vadd.f32 %v233, %v234
        %v276 = vadd.f32 %v275, %v235
        %v277 = vadd.f32 %v276, %v236
        %278 = vadd.xlane.f32.xlu0 %v277
        %v279 = vpop.xlane.xlu0 %278
        %v280 = vadd.f32 %v237, %v238
        %v281 = vadd.f32 %v280, %v239
        %v282 = vadd.f32 %v281, %v240
        %283 = vadd.xlane.f32.xlu0 %v282
        %v284 = vpop.xlane.xlu0 %283
        %v285 = vadd.f32 %v241, %v242
        %v286 = vadd.f32 %v285, %v243
        %v287 = vadd.f32 %v286, %v244
        %288 = vadd.xlane.f32.xlu0 %v287
        %v289 = vpop.xlane.xlu0 %288
        %v290 = vmax.f32 %v249, 1e-24
        %v291 = vmax.f32 %v254, 1e-24
        %v292 = vmax.f32 %v259, 1e-24
        %v293 = vmax.f32 %v264, 1e-24
        %v294 = vmax.f32 %v269, 1e-24
        %v295 = vmax.f32 %v274, 1e-24
        %v296 = vmax.f32 %v279, 1e-24
        %v297 = vmax.f32 %v284, 1e-24
        %v298 = vmax.f32 %v289, 1e-24
        %v299 = vrsqrt.pop %v290
        %v300 = vrsqrt.pop %v291
        %v301 = vrsqrt.pop %v292
        %v302 = vrsqrt.pop %v293
        %v303 = vrsqrt.pop %v294
        %v304 = vrsqrt.pop %v295
        %v305 = vrsqrt.pop %v296
        %v306 = vrsqrt.pop %v297
        %v307 = vrsqrt.pop %v298
        %v308 = vmul.f32 %v173, %v299
        %v309 = vmul.f32 %v174, %v299
        %v310 = vmul.f32 %v175, %v299
        %v311 = vmul.f32 %v176, %v299
        %v312 = vmul.f32 %v177, %v300
        %v313 = vmul.f32 %v178, %v300
        %v314 = vmul.f32 %v179, %v300
        %v315 = vmul.f32 %v180, %v300
        %v316 = vmul.f32 %v181, %v301
        %v317 = vmul.f32 %v182, %v301
        %v318 = vmul.f32 %v183, %v301
        %v319 = vmul.f32 %v184, %v301
        %v320 = vmul.f32 %v185, %v302
        %v321 = vmul.f32 %v186, %v302
        %v322 = vmul.f32 %v187, %v302
        %v323 = vmul.f32 %v188, %v302
        %v324 = vmul.f32 %v189, %v303
        %v325 = vmul.f32 %v190, %v303
        %v326 = vmul.f32 %v191, %v303
        %v327 = vmul.f32 %v192, %v303
        %v328 = vmul.f32 %v193, %v304
        %v329 = vmul.f32 %v194, %v304
        %v330 = vmul.f32 %v195, %v304
        %v331 = vmul.f32 %v196, %v304
        %v332 = vmul.f32 %v197, %v305
        %v333 = vmul.f32 %v198, %v305
        %v334 = vmul.f32 %v199, %v305
        %v335 = vmul.f32 %v200, %v305
        %v336 = vmul.f32 %v201, %v306
        %v337 = vmul.f32 %v202, %v306
        %v338 = vmul.f32 %v203, %v306
        %v339 = vmul.f32 %v204, %v306
        %v340 = vmul.f32 %v205, %v307
        %v341 = vmul.f32 %v206, %v307
        %v342 = vmul.f32 %v207, %v307
        %v343 = vmul.f32 %v208, %v307
        %344 = vst [vmem:[%s142] sm:$0xff] %v308
        %345 = vst [vmem:[%s142 + $0x8] sm:$0xff] %v309
        %346 = vst [vmem:[%s142 + $0x10] sm:$0xff] %v310
        %347 = vst [vmem:[%s142 + $0x18] sm:$0xff] %v311
        %348 = vst [vmem:[%s142 + $0x20] sm:$0xff] %v312
        %349 = vst [vmem:[%s142 + $0x28] sm:$0xff] %v313
        %350 = vst [vmem:[%s142 + $0x30] sm:$0xff] %v314
        %351 = vst [vmem:[%s142 + $0x38] sm:$0xff] %v315
        %352 = vst [vmem:[%s142 + $0x40] sm:$0xff] %v316
        %353 = vst [vmem:[%s142 + $0x48] sm:$0xff] %v317
        %354 = vst [vmem:[%s142 + $0x50] sm:$0xff] %v318
        %355 = vst [vmem:[%s142 + $0x58] sm:$0xff] %v319
        %356 = vst [vmem:[%s142 + $0x60] sm:$0xff] %v320
        %357 = vst [vmem:[%s142 + $0x68] sm:$0xff] %v321
        %358 = vst [vmem:[%s142 + $0x70] sm:$0xff] %v322
        %359 = vst [vmem:[%s142 + $0x78] sm:$0xff] %v323
        %360 = vst [vmem:[%s142 + $0x80] sm:$0xff] %v324
        %361 = vst [vmem:[%s142 + $0x88] sm:$0xff] %v325
        %362 = vst [vmem:[%s142 + $0x90] sm:$0xff] %v326
        %363 = vst [vmem:[%s142 + $0x98] sm:$0xff] %v327
        %364 = vst [vmem:[%s142 + $0xa0] sm:$0xff] %v328
        %365 = vst [vmem:[%s142 + $0xa8] sm:$0xff] %v329
        %366 = vst [vmem:[%s142 + $0xb0] sm:$0xff] %v330
        %367 = vst [vmem:[%s142 + $0xb8] sm:$0xff] %v331
        %368 = vst [vmem:[%s142 + $0xc0] sm:$0xff] %v332
        %369 = vst [vmem:[%s142 + $0xc8] sm:$0xff] %v333
        %370 = vst [vmem:[%s142 + $0xd0] sm:$0xff] %v334
        %371 = vst [vmem:[%s142 + $0xd8] sm:$0xff] %v335
        %372 = vst [vmem:[%s142 + $0xe0] sm:$0xff] %v336
        %373 = vst [vmem:[%s142 + $0xe8] sm:$0xff] %v337
        %374 = vst [vmem:[%s142 + $0xf0] sm:$0xff] %v338
        %375 = vst [vmem:[%s142 + $0xf8] sm:$0xff] %v339
        %376 = vst [vmem:[%s142 + $0x100] sm:$0xff] %v340
        %377 = vst [vmem:[%s142 + $0x108] sm:$0xff] %v341
        %378 = vst [vmem:[%s142 + $0x110] sm:$0xff] %v342
        %379 = vst [vmem:[%s142 + $0x118] sm:$0xff] %v343
        %s380 = sand.u32 %s52, 1
        %s381 = scalar_lea.sflag [#allocation4], %s380
        %s382 = sand.u32 %s52, 1
        %s383 = smul.addr %s382, 288
        %s384 = scalar_lea.vmem [#allocation5], %s383
        // Predicated region
        $region29: #{tpu_custom_call.1} parent=23 // pred_check
          %p385 = pneg %p62
        $region30: #{tpu_custom_call.1} parent=23 // pred_check_branch
          %387 = sbr.rel (%p385) target = $region32
        $region31: #{tpu_custom_call.1} parent=23 // pred_region
          %s388 = smul.u32 9, %s18
          %s389 = ssub.s32 17, %s388
          %p390 = scmp.lt.s32.totalorder %s389, 9
          %s391 = scalar_select %p390, %s389, 9
          %s392 = smul.u32 128, %s391
          %s393 = smul.u32 %s392, 4
          %s395 = ssub.s32 4608, %s393
          %396 = vsyncadd %s381, %s395
          %p397 = scmp.ne.s32.totalorder 0, %s393
          %s398 = smul.addr %s388, 4
          %s399 = smul.addr %s398, 128
          %s400 = scalar_lea.hbm %s1, %s399
          %s401 = smul.u32 32, %s391
          %s402 = sshll.u32 %s384, 4
          %s403 = int_to_ptr.vmem [resolvable:$true] %s402
          %s404 = sshll.u32 %s401, 4
          %408 = dma.vmem_to_hbm [thread:$0]  (%p397), %s403, %s404, %s400, %s381, 512, 512, 32
        $region32: #{tpu_custom_call.1} parent=23 // pred_fallthru
          _
      $region24: #{tpu_custom_call.1} parent=5 // pred_fallthru
        _
      %p409 = scmp.le.s32.totalorder 2, %s13
      // Predicated region
      $region33: #{tpu_custom_call.1} parent=5 // pred_check
        %p410 = pneg %p409
      $region34: #{tpu_custom_call.1} parent=5 // pred_check_branch
        %412 = sbr.rel (%p410) target = $region36
      $region35: #{tpu_custom_call.1} parent=5 // pred_region
        %s413 = ssub.s32 %s13, 2
        // Predicated region
        $region37: #{tpu_custom_call.1} parent=35 // pred_check
          %p414 = pneg %p68
        $region38: #{tpu_custom_call.1} parent=35 // pred_check_branch
          %416 = sbr.rel (%p414) target = $region40
        $region39: #{tpu_custom_call.1} parent=35 // pred_region
          %s417 = sand.u32 %s53, 1
          %s418 = scalar_lea.sflag [#allocation4], %s417
          %s419 = sand.u32 %s53, 1
          %s420 = smul.addr %s419, 288
          %s421 = scalar_lea.vmem [#allocation5], %s420
          %422 = dma.done %s418, 4608
        $region40: #{tpu_custom_call.1} parent=35 // pred_fallthru
          _
      $region36: #{tpu_custom_call.1} parent=5 // pred_fallthru
        _
    $region6: #{tpu_custom_call.1} parent=1 // loop_footer
      %s17 = sadd.s32 1, %s13
    $region7: #{tpu_custom_call.1} parent=1 // loop_footer_branch
      %12 = sbr.rel target = $region3
    $region8: #{tpu_custom_call.1} parent=1 // loop_exit
      _
    %423 = vsyncpa [#allocation3], 1
    %s424 = scalar_lea.sflag [#allocation3], 1
    %425 = vsyncpa %s424, 1
    %426 = vsyncpa [#allocation4], 1
    %s427 = scalar_lea.sflag [#allocation4], 1
    %428 = vsyncpa %s427, 1

</llo_original>
